<compile_context>
chip_gen: v5e
topology: v5e:2x2
jax: 0.10.0
libtpu: 0.0.40
codegen_flags: <defaults>
</compile_context>

<pallas_src>
import jax
import jax.numpy as jnp
from jax import lax
from jax.experimental import pallas as pl
from jax.experimental.pallas import tpu as pltpu


def _round_up(x, m):
    return ((x + m - 1) // m) * m


def _pad_to(x, shape):
    """Zero-pad `x` up to `shape` (no-op if already that shape)."""
    if tuple(x.shape) == tuple(shape):
        return x
    pads = [(0, s - xs) for xs, s in zip(x.shape, shape)]
    return jnp.pad(x, pads)


def _pick_time_block(requested, T, BB, Dp, Hp, in_itemsize, out_itemsize,
                     budget_bytes=24 * 1024 * 1024):
    """Largest time block whose streamed blocks + proj scratch fit the budget."""
    per_t = (2 * BB * Dp * in_itemsize     # x block, double-buffered
             + 2 * BB * Hp * out_itemsize  # output block, double-buffered
             + BB * Hp * 4)                # f32 proj scratch
    cap = max(1, budget_bytes // max(per_t, 1))
    return int(max(1, min(requested, T, cap)))


def _rnn_block_kernel(x_ref, wxh_ref, whh_ref, b_ref, h0_ref, out_ref,
                      h_scratch, proj_scratch):
    """One grid step = TT consecutive time steps for one batch tile.

    x_ref    : (TT, BB, Dp)  raw inputs (bf16, streamed)
    wxh_ref  : (Dp, Hp)      input weight  (resident, bf16)
    whh_ref  : (Hp, Hp)      recurrent weight (resident, bf16)
    b_ref    : (1, Hp)       bias (f32)
    h0_ref   : (BB, Hp)      initial hidden state (f32, per batch tile)
    out_ref  : (TT, BB, Hp)  per-step hidden states (caller dtype)
    h_scratch: (BB, Hp) f32  hidden state carried across time blocks
    proj_scratch: (TT, BB, Hp) f32  block input projection
    """
    t_blk = pl.program_id(1)

    @pl.when(t_blk == 0)
    def _():
        h_scratch[...] = h0_ref[...]

    tt, bb, dp = x_ref.shape
    hp = whh_ref.shape[1]

    # ---- Block input projection: one large MXU matmul per time block. ----
    x2d = x_ref[...].reshape(tt * bb, dp)
    proj = jnp.dot(x2d, wxh_ref[...], preferred_element_type=jnp.float32)
    proj_scratch[...] = proj.reshape(tt, bb, hp) + b_ref[...]

    # Hoist W_hh into vregs only when it comfortably fits the register file;
    # otherwise re-load from VMEM inside the loop (avoids spills on large H).
    mm_dtype = whh_ref.dtype
    hoist = hp * hp * jnp.dtype(mm_dtype).itemsize <= 128 * 1024
    whh_hoisted = whh_ref[...] if hoist else None

    def step(i, h):
        whh = whh_hoisted if hoist else whh_ref[...]
        pre = proj_scratch[i] + jnp.dot(h.astype(mm_dtype), whh,
                                        preferred_element_type=jnp.float32)
        h_new = jnp.tanh(pre)
        out_ref[i] = h_new.astype(out_ref.dtype)
        return h_new

    unroll = True if tt <= 32 else 8
    h_last = lax.fori_loop(0, tt, step, h_scratch[...], unroll=unroll)
    h_scratch[...] = h_last


def rnn_scratch_forward(inputs, W_xh, W_hh, b_h, state=None, *,
                        time_block=32, batch_block=None,
                        compute_dtype=jnp.bfloat16):
    """inputs: (T, B, num_inputs). Returns (outputs (T,B,H), final_state (B,H))."""
    T, B, D = inputs.shape
    H = W_xh.shape[1]
    out_dtype = inputs.dtype

    if state is None:
        h0 = jnp.zeros((B, H), jnp.float32)
    else:
        (h0,) = state
        h0 = h0.astype(jnp.float32)

    if T == 0:  # degenerate: no steps, state unchanged
        return jnp.zeros((0, B, H), out_dtype), h0.astype(out_dtype)

    in_itemsize = jnp.dtype(compute_dtype).itemsize
    out_itemsize = jnp.dtype(out_dtype).itemsize
    sub = 16 if out_itemsize == 2 else 8   # sublane packing for output stores

    Bp = _round_up(B, sub)
    Hp = _round_up(H, 128)
    Dp = _round_up(D, 128)

    # Batch tiling: keep the whole batch in one full-height MXU tile when it
    # fits; otherwise 256-row tiles on a leading "parallel" grid axis (v7x 2 TCs).
    if batch_block is None:
        BB = Bp if Bp <= 256 else 256
    else:
        BB = _round_up(min(batch_block, Bp), sub)
    Bp = _round_up(Bp, BB)
    n_btiles = Bp // BB

    TT = _pick_time_block(time_block, T, BB, Dp, Hp, in_itemsize, out_itemsize)
    Tp = _round_up(T, TT)
    n_tblocks = Tp // TT

    # ---- Pad operands. Zero padding is exact: padded rows/cols stay zero
    # through tanh(0) = 0 and zero weight rows/cols.
    x_p = _pad_to(inputs.astype(compute_dtype), (Tp, Bp, Dp))
    W_xh_p = _pad_to(W_xh.astype(compute_dtype), (Dp, Hp))
    W_hh_p = _pad_to(W_hh.astype(compute_dtype), (Hp, Hp))
    b_h_p = _pad_to(b_h.astype(jnp.float32).reshape(1, H), (1, Hp))
    h0_p = _pad_to(h0, (Bp, Hp))

    grid_spec = pltpu.PrefetchScalarGridSpec(
        num_scalar_prefetch=0,
        grid=(n_btiles, n_tblocks),
        in_specs=[
            pl.BlockSpec((TT, BB, Dp), lambda b, t: (t, b, 0)),   # x (streamed)
            pl.BlockSpec((Dp, Hp), lambda b, t: (0, 0)),          # W_xh (resident)
            pl.BlockSpec((Hp, Hp), lambda b, t: (0, 0)),          # W_hh (resident)
            pl.BlockSpec((1, Hp), lambda b, t: (0, 0)),           # b_h
            pl.BlockSpec((BB, Hp), lambda b, t: (b, 0)),          # h0 (per batch tile)
        ],
        out_specs=pl.BlockSpec((TT, BB, Hp), lambda b, t: (t, b, 0)),
        scratch_shapes=[
            pltpu.VMEM((BB, Hp), jnp.float32),       # carried hidden state
            pltpu.VMEM((TT, BB, Hp), jnp.float32),   # block input projection
        ],
    )

    # Explicit scoped-VMEM budget (blocks are double-buffered by the pipeline).
    vmem_est = (2 * TT * BB * Dp * in_itemsize
                + 2 * TT * BB * Hp * out_itemsize
                + 2 * (Dp * Hp + Hp * Hp) * in_itemsize
                + 2 * (Hp + BB * Hp) * 4
                + (BB * Hp + TT * BB * Hp) * 4)
    vmem_limit = int(min(64 * 1024 * 1024, max(32 * 1024 * 1024, 2 * vmem_est)))

    out_p = pl.pallas_call(
        _rnn_block_kernel,
        out_shape=jax.ShapeDtypeStruct((Tp, Bp, Hp), out_dtype),
        grid_spec=grid_spec,
        compiler_params=pltpu.CompilerParams(
            dimension_semantics=("parallel", "arbitrary"),  # batch ∥, time sequential
            vmem_limit_bytes=vmem_limit,
        ),
    )(x_p, W_xh_p, W_hh_p, b_h_p, h0_p)

    outputs = out_p[:T, :B, :H]
    # Final state must come from outputs[T-1]: padded time steps (t >= T) keep
    # evolving the in-kernel scratch, so the scratch is NOT a valid final state.
    last_state = outputs[-1]
    return outputs, last_state


def rnn_scratch_reference(inputs, W_xh, W_hh, b_h, state=None):
    """Pure-JAX f32 reference mirroring the PyTorch forward."""
    T, B, D = inputs.shape
    H = W_xh.shape[1]
    h = jnp.zeros((B, H), inputs.dtype) if state is None else state[0]
    outs = []
    for t in range(T):
        h = jnp.tanh(inputs[t] @ W_xh + h @ W_hh + b_h)
        outs.append(h)
    return jnp.stack(outs, axis=0), h


if __name__ == "__main__":
    num_inputs, num_hiddens, sigma = 16, 32, 0.01
    T, B = 8, 4

    key = jax.random.PRNGKey(0)
    k1, k2, k3 = jax.random.split(key, 3)

    # Deterministic parameter init matching the module's __init__ shapes.
    W_xh = jax.random.normal(k1, (num_inputs, num_hiddens), jnp.float32) * sigma
    W_hh = jax.random.normal(k2, (num_hiddens, num_hiddens), jnp.float32) * sigma
    b_h = jnp.zeros((num_hiddens,), jnp.float32)

    inputs = jax.random.normal(k3, (T, B, num_inputs), jnp.float32)

    outputs, last_state = rnn_scratch_forward(inputs, W_xh, W_hh, b_h)
    jax.block_until_ready(outputs)
    jax.block_until_ready(last_state)

    # Correctness vs. the pure-f32 reference. Tolerances account for bf16
    # matmul operands (f32 accumulation) — expected precision, not a bug.
    ref_out, ref_last = rnn_scratch_reference(inputs, W_xh, W_hh, b_h)
    assert outputs.shape == (T, B, num_hiddens)
    assert jnp.allclose(outputs, ref_out, atol=2e-3, rtol=2e-2)
    assert jnp.allclose(last_state, ref_last, atol=2e-3, rtol=2e-2)

    # Also exercise the explicit-state path once.
    outputs2, last_state2 = rnn_scratch_forward(inputs, W_xh, W_hh, b_h,
                                                state=(ref_last,))
    jax.block_until_ready(outputs2)
    ref_out2, ref_last2 = rnn_scratch_reference(inputs, W_xh, W_hh, b_h,
                                                state=(ref_last,))
    assert jnp.allclose(outputs2, ref_out2, atol=2e-3, rtol=2e-2)
    assert jnp.allclose(last_state2, ref_last2, atol=2e-3, rtol=2e-2)

    print("KERNEL_OK")
</pallas_src>

<mosaic_0001>
module attributes {stable_mosaic.version = 11 : i64} {
  func.func @_rnn_block_kernel(%arg0: i32, %arg1: i32, %arg2: memref<8x8x128xbf16, #tpu.memory_space<vmem>>, %arg3: memref<128x128xbf16, #tpu.memory_space<vmem>>, %arg4: memref<128x128xbf16, #tpu.memory_space<vmem>>, %arg5: memref<1x128xf32, #tpu.memory_space<vmem>>, %arg6: memref<8x128xf32, #tpu.memory_space<vmem>>, %arg7: memref<8x8x128xf32, #tpu.memory_space<vmem>>, %arg8: memref<8x128xf32, #tpu.memory_space<vmem>>, %arg9: memref<8x8x128xf32, #tpu.memory_space<vmem>>) attributes {dimension_semantics = [#tpu.dimension_semantics<parallel>, #tpu.dimension_semantics<arbitrary>], iteration_bounds = array<i64: 1, 1>, scalar_prefetch = 0 : i64, scratch_operands = 2 : i64, tpu.core_type = #tpu.core_type<tc>, window_params = [{transform_indices = @transform_0, window_bounds = array<i64: 8, 8, 128>}, {pipeline_mode = #tpu.pipeline_mode<synchronous>, transform_indices = @transform_1, window_bounds = array<i64: 128, 128>}, {pipeline_mode = #tpu.pipeline_mode<synchronous>, transform_indices = @transform_2, window_bounds = array<i64: 128, 128>}, {pipeline_mode = #tpu.pipeline_mode<synchronous>, transform_indices = @transform_3, window_bounds = array<i64: 1, 128>}, {transform_indices = @transform_4, window_bounds = array<i64: 8, 128>}, {transform_indices = @transform_5, window_bounds = array<i64: 8, 8, 128>}]} {
    %c0_i32 = arith.constant 0 : i32
    %0 = arith.cmpi eq, %arg1, %c0_i32 : i32
    %1 = arith.extui %0 : i1 to i32
    %c0_i32_0 = arith.constant 0 : i32
    %2 = arith.cmpi ne, %1, %c0_i32_0 : i32
    scf.if %2 {
      %c0_57 = arith.constant 0 : index
      %c0_58 = arith.constant 0 : index
      %104 = vector.load %arg6[%c0_57, %c0_58] : memref<8x128xf32, #tpu.memory_space<vmem>>, vector<8x128xf32>
      %c0_59 = arith.constant 0 : index
      %c0_60 = arith.constant 0 : index
      %105 = vector.load %arg8[%c0_59, %c0_60] : memref<8x128xf32, #tpu.memory_space<vmem>>, vector<8x128xf32>
      tpu.vector_store %arg8[%c0_59, %c0_60], %104 {strides = array<i32>} : memref<8x128xf32, #tpu.memory_space<vmem>>, vector<8x128xf32>,
    } else {
    }
    %c0 = arith.constant 0 : index
    %c0_1 = arith.constant 0 : index
    %c0_2 = arith.constant 0 : index
    %3 = vector.load %arg2[%c0, %c0_1, %c0_2] : memref<8x8x128xbf16, #tpu.memory_space<vmem>>, vector<8x8x128xbf16>
    %4 = vector.shape_cast %3 : vector<8x8x128xbf16> to vector<64x128xbf16>
    %c0_3 = arith.constant 0 : index
    %c0_4 = arith.constant 0 : index
    %5 = vector.load %arg3[%c0_3, %c0_4] : memref<128x128xbf16, #tpu.memory_space<vmem>>, vector<128x128xbf16>
    %cst = arith.constant dense<0.000000e+00> : vector<64x128xf32>
    %6 = tpu.matmul %4, %5, %cst {dimension_numbers = #tpu.dot_dimension_numbers<[1], [0], [0], [1], [0, 0, 1, 1], [], []>} : vector<64x128xbf16>, vector<128x128xbf16>, vector<64x128xf32> -> vector<64x128xf32>
    %7 = vector.shape_cast %6 : vector<64x128xf32> to vector<8x8x128xf32>
    %c0_5 = arith.constant 0 : index
    %c0_6 = arith.constant 0 : index
    %8 = vector.load %arg5[%c0_5, %c0_6] : memref<1x128xf32, #tpu.memory_space<vmem>>, vector<1x128xf32>
    %9 = vector.shape_cast %8 : vector<1x128xf32> to vector<1x1x128xf32>
    %10 = vector.broadcast %9 : vector<1x1x128xf32> to vector<8x8x128xf32>
    %11 = arith.addf %7, %10 : vector<8x8x128xf32>
    %c0_7 = arith.constant 0 : index
    %c0_8 = arith.constant 0 : index
    %c0_9 = arith.constant 0 : index
    %12 = vector.load %arg9[%c0_7, %c0_8, %c0_9] : memref<8x8x128xf32, #tpu.memory_space<vmem>>, vector<8x8x128xf32>
    tpu.vector_store %arg9[%c0_7, %c0_8, %c0_9], %11 {strides = array<i32>} : memref<8x8x128xf32, #tpu.memory_space<vmem>>, vector<8x8x128xf32>,
    %c0_10 = arith.constant 0 : index
    %c0_11 = arith.constant 0 : index
    %13 = vector.load %arg4[%c0_10, %c0_11] : memref<128x128xbf16, #tpu.memory_space<vmem>>, vector<128x128xbf16>
    %c0_12 = arith.constant 0 : index
    %c0_13 = arith.constant 0 : index
    %14 = vector.load %arg8[%c0_12, %c0_13] : memref<8x128xf32, #tpu.memory_space<vmem>>, vector<8x128xf32>
    %c0_i32_14 = arith.constant 0 : i32
    %15 = arith.index_cast %c0_i32_14 : i32 to index
    %c0_15 = arith.constant 0 : index
    %c0_16 = arith.constant 0 : index
    %16 = vector.load %arg9[%15, %c0_15, %c0_16] : memref<8x8x128xf32, #tpu.memory_space<vmem>>, vector<1x8x128xf32>
    %17 = vector.shape_cast %16 : vector<1x8x128xf32> to vector<8x128xf32>
    %18 = arith.truncf %14 : vector<8x128xf32> to vector<8x128xbf16>
    %cst_17 = arith.constant dense<0.000000e+00> : vector<8x128xf32>
    %19 = tpu.matmul %18, %13, %cst_17 {dimension_numbers = #tpu.dot_dimension_numbers<[1], [0], [0], [1], [0, 0, 1, 1], [], []>} : vector<8x128xbf16>, vector<128x128xbf16>, vector<8x128xf32> -> vector<8x128xf32>
    %20 = arith.addf %17, %19 : vector<8x128xf32>
    %21 = math.tanh %20 : vector<8x128xf32>
    %22 = arith.index_cast %c0_i32_14 : i32 to index
    %c0_18 = arith.constant 0 : index
    %c0_19 = arith.constant 0 : index
    %23 = vector.load %arg7[%22, %c0_18, %c0_19] : memref<8x8x128xf32, #tpu.memory_space<vmem>>, vector<1x8x128xf32>
    %24 = vector.shape_cast %23 : vector<1x8x128xf32> to vector<8x128xf32>
    %25 = vector.shape_cast %21 : vector<8x128xf32> to vector<1x8x128xf32>
    tpu.vector_store %arg7[%22, %c0_18, %c0_19], %25 {strides = array<i32>} : memref<8x8x128xf32, #tpu.memory_space<vmem>>, vector<1x8x128xf32>,
    %c1_i32 = arith.constant 1 : i32
    %26 = arith.index_cast %c1_i32 : i32 to index
    %c0_20 = arith.constant 0 : index
    %c0_21 = arith.constant 0 : index
    %27 = vector.load %arg9[%26, %c0_20, %c0_21] : memref<8x8x128xf32, #tpu.memory_space<vmem>>, vector<1x8x128xf32>
    %28 = vector.shape_cast %27 : vector<1x8x128xf32> to vector<8x128xf32>
    %29 = arith.truncf %21 : vector<8x128xf32> to vector<8x128xbf16>
    %cst_22 = arith.constant dense<0.000000e+00> : vector<8x128xf32>
    %30 = tpu.matmul %29, %13, %cst_22 {dimension_numbers = #tpu.dot_dimension_numbers<[1], [0], [0], [1], [0, 0, 1, 1], [], []>} : vector<8x128xbf16>, vector<128x128xbf16>, vector<8x128xf32> -> vector<8x128xf32>
    %31 = arith.addf %28, %30 : vector<8x128xf32>
    %32 = math.tanh %31 : vector<8x128xf32>
    %33 = arith.index_cast %c1_i32 : i32 to index
    %c0_23 = arith.constant 0 : index
    %c0_24 = arith.constant 0 : index
    %34 = vector.load %arg7[%33, %c0_23, %c0_24] : memref<8x8x128xf32, #tpu.memory_space<vmem>>, vector<1x8x128xf32>
    %35 = vector.shape_cast %34 : vector<1x8x128xf32> to vector<8x128xf32>
    %36 = vector.shape_cast %32 : vector<8x128xf32> to vector<1x8x128xf32>
    tpu.vector_store %arg7[%33, %c0_23, %c0_24], %36 {strides = array<i32>} : memref<8x8x128xf32, #tpu.memory_space<vmem>>, vector<1x8x128xf32>,
    %c2_i32 = arith.constant 2 : i32
    %37 = arith.index_cast %c2_i32 : i32 to index
    %c0_25 = arith.constant 0 : index
    %c0_26 = arith.constant 0 : index
    %38 = vector.load %arg9[%37, %c0_25, %c0_26] : memref<8x8x128xf32, #tpu.memory_space<vmem>>, vector<1x8x128xf32>
    %39 = vector.shape_cast %38 : vector<1x8x128xf32> to vector<8x128xf32>
    %40 = arith.truncf %32 : vector<8x128xf32> to vector<8x128xbf16>
    %cst_27 = arith.constant dense<0.000000e+00> : vector<8x128xf32>
    %41 = tpu.matmul %40, %13, %cst_27 {dimension_numbers = #tpu.dot_dimension_numbers<[1], [0], [0], [1], [0, 0, 1, 1], [], []>} : vector<8x128xbf16>, vector<128x128xbf16>, vector<8x128xf32> -> vector<8x128xf32>
    %42 = arith.addf %39, %41 : vector<8x128xf32>
    %43 = math.tanh %42 : vector<8x128xf32>
    %44 = arith.index_cast %c2_i32 : i32 to index
    %c0_28 = arith.constant 0 : index
    %c0_29 = arith.constant 0 : index
    %45 = vector.load %arg7[%44, %c0_28, %c0_29] : memref<8x8x128xf32, #tpu.memory_space<vmem>>, vector<1x8x128xf32>
    %46 = vector.shape_cast %45 : vector<1x8x128xf32> to vector<8x128xf32>
    %47 = vector.shape_cast %43 : vector<8x128xf32> to vector<1x8x128xf32>
    tpu.vector_store %arg7[%44, %c0_28, %c0_29], %47 {strides = array<i32>} : memref<8x8x128xf32, #tpu.memory_space<vmem>>, vector<1x8x128xf32>,
    %c3_i32 = arith.constant 3 : i32
    %48 = arith.index_cast %c3_i32 : i32 to index
    %c0_30 = arith.constant 0 : index
    %c0_31 = arith.constant 0 : index
    %49 = vector.load %arg9[%48, %c0_30, %c0_31] : memref<8x8x128xf32, #tpu.memory_space<vmem>>, vector<1x8x128xf32>
    %50 = vector.shape_cast %49 : vector<1x8x128xf32> to vector<8x128xf32>
    %51 = arith.truncf %43 : vector<8x128xf32> to vector<8x128xbf16>
    %cst_32 = arith.constant dense<0.000000e+00> : vector<8x128xf32>
    %52 = tpu.matmul %51, %13, %cst_32 {dimension_numbers = #tpu.dot_dimension_numbers<[1], [0], [0], [1], [0, 0, 1, 1], [], []>} : vector<8x128xbf16>, vector<128x128xbf16>, vector<8x128xf32> -> vector<8x128xf32>
    %53 = arith.addf %50, %52 : vector<8x128xf32>
    %54 = math.tanh %53 : vector<8x128xf32>
    %55 = arith.index_cast %c3_i32 : i32 to index
    %c0_33 = arith.constant 0 : index
    %c0_34 = arith.constant 0 : index
    %56 = vector.load %arg7[%55, %c0_33, %c0_34] : memref<8x8x128xf32, #tpu.memory_space<vmem>>, vector<1x8x128xf32>
    %57 = vector.shape_cast %56 : vector<1x8x128xf32> to vector<8x128xf32>
    %58 = vector.shape_cast %54 : vector<8x128xf32> to vector<1x8x128xf32>
    tpu.vector_store %arg7[%55, %c0_33, %c0_34], %58 {strides = array<i32>} : memref<8x8x128xf32, #tpu.memory_space<vmem>>, vector<1x8x128xf32>,
    %c4_i32 = arith.constant 4 : i32
    %59 = arith.index_cast %c4_i32 : i32 to index
    %c0_35 = arith.constant 0 : index
    %c0_36 = arith.constant 0 : index
    %60 = vector.load %arg9[%59, %c0_35, %c0_36] : memref<8x8x128xf32, #tpu.memory_space<vmem>>, vector<1x8x128xf32>
    %61 = vector.shape_cast %60 : vector<1x8x128xf32> to vector<8x128xf32>
    %62 = arith.truncf %54 : vector<8x128xf32> to vector<8x128xbf16>
    %cst_37 = arith.constant dense<0.000000e+00> : vector<8x128xf32>
    %63 = tpu.matmul %62, %13, %cst_37 {dimension_numbers = #tpu.dot_dimension_numbers<[1], [0], [0], [1], [0, 0, 1, 1], [], []>} : vector<8x128xbf16>, vector<128x128xbf16>, vector<8x128xf32> -> vector<8x128xf32>
    %64 = arith.addf %61, %63 : vector<8x128xf32>
    %65 = math.tanh %64 : vector<8x128xf32>
    %66 = arith.index_cast %c4_i32 : i32 to index
    %c0_38 = arith.constant 0 : index
    %c0_39 = arith.constant 0 : index
    %67 = vector.load %arg7[%66, %c0_38, %c0_39] : memref<8x8x128xf32, #tpu.memory_space<vmem>>, vector<1x8x128xf32>
    %68 = vector.shape_cast %67 : vector<1x8x128xf32> to vector<8x128xf32>
    %69 = vector.shape_cast %65 : vector<8x128xf32> to vector<1x8x128xf32>
    tpu.vector_store %arg7[%66, %c0_38, %c0_39], %69 {strides = array<i32>} : memref<8x8x128xf32, #tpu.memory_space<vmem>>, vector<1x8x128xf32>,
    %c5_i32 = arith.constant 5 : i32
    %70 = arith.index_cast %c5_i32 : i32 to index
    %c0_40 = arith.constant 0 : index
    %c0_41 = arith.constant 0 : index
    %71 = vector.load %arg9[%70, %c0_40, %c0_41] : memref<8x8x128xf32, #tpu.memory_space<vmem>>, vector<1x8x128xf32>
    %72 = vector.shape_cast %71 : vector<1x8x128xf32> to vector<8x128xf32>
    %73 = arith.truncf %65 : vector<8x128xf32> to vector<8x128xbf16>
    %cst_42 = arith.constant dense<0.000000e+00> : vector<8x128xf32>
    %74 = tpu.matmul %73, %13, %cst_42 {dimension_numbers = #tpu.dot_dimension_numbers<[1], [0], [0], [1], [0, 0, 1, 1], [], []>} : vector<8x128xbf16>, vector<128x128xbf16>, vector<8x128xf32> -> vector<8x128xf32>
    %75 = arith.addf %72, %74 : vector<8x128xf32>
    %76 = math.tanh %75 : vector<8x128xf32>
    %77 = arith.index_cast %c5_i32 : i32 to index
    %c0_43 = arith.constant 0 : index
    %c0_44 = arith.constant 0 : index
    %78 = vector.load %arg7[%77, %c0_43, %c0_44] : memref<8x8x128xf32, #tpu.memory_space<vmem>>, vector<1x8x128xf32>
    %79 = vector.shape_cast %78 : vector<1x8x128xf32> to vector<8x128xf32>
    %80 = vector.shape_cast %76 : vector<8x128xf32> to vector<1x8x128xf32>
    tpu.vector_store %arg7[%77, %c0_43, %c0_44], %80 {strides = array<i32>} : memref<8x8x128xf32, #tpu.memory_space<vmem>>, vector<1x8x128xf32>,
    %c6_i32 = arith.constant 6 : i32
    %81 = arith.index_cast %c6_i32 : i32 to index
    %c0_45 = arith.constant 0 : index
    %c0_46 = arith.constant 0 : index
    %82 = vector.load %arg9[%81, %c0_45, %c0_46] : memref<8x8x128xf32, #tpu.memory_space<vmem>>, vector<1x8x128xf32>
    %83 = vector.shape_cast %82 : vector<1x8x128xf32> to vector<8x128xf32>
    %84 = arith.truncf %76 : vector<8x128xf32> to vector<8x128xbf16>
    %cst_47 = arith.constant dense<0.000000e+00> : vector<8x128xf32>
    %85 = tpu.matmul %84, %13, %cst_47 {dimension_numbers = #tpu.dot_dimension_numbers<[1], [0], [0], [1], [0, 0, 1, 1], [], []>} : vector<8x128xbf16>, vector<128x128xbf16>, vector<8x128xf32> -> vector<8x128xf32>
    %86 = arith.addf %83, %85 : vector<8x128xf32>
    %87 = math.tanh %86 : vector<8x128xf32>
    %88 = arith.index_cast %c6_i32 : i32 to index
    %c0_48 = arith.constant 0 : index
    %c0_49 = arith.constant 0 : index
    %89 = vector.load %arg7[%88, %c0_48, %c0_49] : memref<8x8x128xf32, #tpu.memory_space<vmem>>, vector<1x8x128xf32>
    %90 = vector.shape_cast %89 : vector<1x8x128xf32> to vector<8x128xf32>
    %91 = vector.shape_cast %87 : vector<8x128xf32> to vector<1x8x128xf32>
    tpu.vector_store %arg7[%88, %c0_48, %c0_49], %91 {strides = array<i32>} : memref<8x8x128xf32, #tpu.memory_space<vmem>>, vector<1x8x128xf32>,
    %c7_i32 = arith.constant 7 : i32
    %92 = arith.index_cast %c7_i32 : i32 to index
    %c0_50 = arith.constant 0 : index
    %c0_51 = arith.constant 0 : index
    %93 = vector.load %arg9[%92, %c0_50, %c0_51] : memref<8x8x128xf32, #tpu.memory_space<vmem>>, vector<1x8x128xf32>
    %94 = vector.shape_cast %93 : vector<1x8x128xf32> to vector<8x128xf32>
    %95 = arith.truncf %87 : vector<8x128xf32> to vector<8x128xbf16>
    %cst_52 = arith.constant dense<0.000000e+00> : vector<8x128xf32>
    %96 = tpu.matmul %95, %13, %cst_52 {dimension_numbers = #tpu.dot_dimension_numbers<[1], [0], [0], [1], [0, 0, 1, 1], [], []>} : vector<8x128xbf16>, vector<128x128xbf16>, vector<8x128xf32> -> vector<8x128xf32>
    %97 = arith.addf %94, %96 : vector<8x128xf32>
    %98 = math.tanh %97 : vector<8x128xf32>
    %99 = arith.index_cast %c7_i32 : i32 to index
    %c0_53 = arith.constant 0 : index
    %c0_54 = arith.constant 0 : index
    %100 = vector.load %arg7[%99, %c0_53, %c0_54] : memref<8x8x128xf32, #tpu.memory_space<vmem>>, vector<1x8x128xf32>
    %101 = vector.shape_cast %100 : vector<1x8x128xf32> to vector<8x128xf32>
    %102 = vector.shape_cast %98 : vector<8x128xf32> to vector<1x8x128xf32>
    tpu.vector_store %arg7[%99, %c0_53, %c0_54], %102 {strides = array<i32>} : memref<8x8x128xf32, #tpu.memory_space<vmem>>, vector<1x8x128xf32>,
    %c8_i32 = arith.constant 8 : i32
    %c0_55 = arith.constant 0 : index
    %c0_56 = arith.constant 0 : index
    %103 = vector.load %arg8[%c0_55, %c0_56] : memref<8x128xf32, #tpu.memory_space<vmem>>, vector<8x128xf32>
    tpu.vector_store %arg8[%c0_55, %c0_56], %98 {strides = array<i32>} : memref<8x128xf32, #tpu.memory_space<vmem>>, vector<8x128xf32>,
    return
  }
  func.func @transform_0(%arg0: i32, %arg1: i32) -> (i32, i32, i32) {
    %c0_i32 = arith.constant 0 : i32
    %c0_i32_0 = arith.constant 0 : i32
    return %arg1, %arg0, %c0_i32 : i32, i32, i32
  }
  func.func @transform_1(%arg0: i32, %arg1: i32) -> (i32, i32) {
    %c0_i32 = arith.constant 0 : i32
    %c0_i32_0 = arith.constant 0 : i32
    %c0_i32_1 = arith.constant 0 : i32
    return %c0_i32, %c0_i32_0 : i32, i32
  }
  func.func @transform_2(%arg0: i32, %arg1: i32) -> (i32, i32) {
    %c0_i32 = arith.constant 0 : i32
    %c0_i32_0 = arith.constant 0 : i32
    %c0_i32_1 = arith.constant 0 : i32
    return %c0_i32, %c0_i32_0 : i32, i32
  }
  func.func @transform_3(%arg0: i32, %arg1: i32) -> (i32, i32) {
    %c0_i32 = arith.constant 0 : i32
    %c0_i32_0 = arith.constant 0 : i32
    %c0_i32_1 = arith.constant 0 : i32
    return %c0_i32, %c0_i32_0 : i32, i32
  }
  func.func @transform_4(%arg0: i32, %arg1: i32) -> (i32, i32) {
    %c0_i32 = arith.constant 0 : i32
    %c0_i32_0 = arith.constant 0 : i32
    return %arg0, %c0_i32 : i32, i32
  }
  func.func @transform_5(%arg0: i32, %arg1: i32) -> (i32, i32, i32) {
    %c0_i32 = arith.constant 0 : i32
    %c0_i32_0 = arith.constant 0 : i32
    return %arg1, %arg0, %c0_i32 : i32, i32, i32
  }
}

</mosaic_0001>

<llo_original>
// kernel: tpu_custom_call.1
$region0: #{tpu_custom_call.1}
  #allocation0 [shape = 'u32[]', space=smem, size = 0x4, offset = 0x4, fixed_abs, tag = 'smem constant byte address 0x4 - core index']
  #allocation1 [shape = 'u32[72,128]{1,0:T(1,128)}', space=vmem, size = 0x9000, scoped, tag = 'internal scratch']
  #allocation2 [shape = 'f32[8,128]{1,0:T(8,128)}', space=vmem, size = 0x1000, scoped, tag = 'scratch operand']
  #allocation3 [shape = 'f32[8,8,128]{2,1,0:T(8,128)}', space=vmem, size = 0x8000, scoped, tag = 'scratch operand']
  %s0 = inlined_call_operand.hbm [shape: bf16[8,8,128], index: 0, kind: input, shape index: {}]
  %s1 = inlined_call_operand.hbm [shape: bf16[128,128], index: 1, kind: input, shape index: {}]
  %s2 = inlined_call_operand.hbm [shape: bf16[128,128], index: 2, kind: input, shape index: {}]
  %s3 = inlined_call_operand.vmem [shape: f32[1,128], index: 3, kind: input, shape index: {}]
  %s4 = inlined_call_operand.hbm [shape: f32[8,128], index: 4, kind: input, shape index: {}]
  %s5 = inlined_call_operand.hbm [shape: f32[8,8,128], index: 5, kind: output, shape index: {}]
  %s6 = sld [smem:[#allocation0]]
  $region50: #{tpu_custom_call.1} parent=0
    _
  %s8 = ssub.s32 1, %s6
  %s9 = scalar_select 0, %s8, %s6
  $region1: #{tpu_custom_call.1} parent=0
    #allocation4 [shape = 'u8[16384]{0}', space=vmem, size = 0x4000, scoped, tag = 'input window, operand 0, single buffered']
    #allocation5 [shape = 's32[1]{0}', space=sflag, size = 0x4, scoped, tag = 'scoped memory for tpu_custom_call.1']
    #allocation6 [shape = 's32[1]{0}', space=sflag, size = 0x4, scoped, tag = 'scoped memory for tpu_custom_call.1']
    #allocation7 [shape = 'u8[32768]{0}', space=vmem, size = 0x8000, scoped, tag = 'input window, operand 1, single buffered']
    #allocation8 [shape = 's32[1]{0}', space=sflag, size = 0x4, scoped, tag = 'scoped memory for tpu_custom_call.1']
    #allocation9 [shape = 'u8[32768]{0}', space=vmem, size = 0x8000, scoped, tag = 'input window, operand 2, single buffered']
    #allocation10 [shape = 'u8[4096]{0}', space=vmem, size = 0x1000, scoped, tag = 'input window, operand 4, single buffered']
    #allocation11 [shape = 's32[1]{0}', space=sflag, size = 0x4, scoped, tag = 'scoped memory for tpu_custom_call.1']
    #allocation12 [shape = 'u8[32768]{0}', space=vmem, size = 0x8000, scoped, tag = 'output window, operand 0, single buffered']
    %10 = vsyncpa [#allocation5], 0
    %11 = vsyncpa [#allocation8], 0
    %12 = vsyncpa [#allocation11], 0
    %13 = vsyncpa [#allocation6], 0
    // Predicated region
    $region2: #{tpu_custom_call.1} parent=1 // pred_check
      _
    $region3: #{tpu_custom_call.1} parent=1 // pred_check_branch
      %15 = sbr.rel (0) target = $region5
    $region4: #{tpu_custom_call.1} parent=1 // pred_region
      %17 = vsyncadd [#allocation5], 0
      %s18 = sshll.u32 %s0, 4
      %s19 = int_to_ptr.hbm [resolvable:$true] %s18
      %s20 = sshll.u32 [#allocation4], 4
      %s21 = int_to_ptr.vmem [resolvable:$true] %s20
      %26 = dma.hbm_to_vmem [thread:$0]  %s19, 512, %s21, [#allocation5], 64, 64, 4
    $region5: #{tpu_custom_call.1} parent=1 // pred_fallthru
      _
    // Predicated region
    $region6: #{tpu_custom_call.1} parent=1 // pred_check
      _
    $region7: #{tpu_custom_call.1} parent=1 // pred_check_branch
      %28 = sbr.rel (0) target = $region9
    $region8: #{tpu_custom_call.1} parent=1 // pred_region
      %30 = vsyncadd [#allocation8], 0
      %s31 = sshll.u32 %s1, 4
      %s32 = int_to_ptr.hbm [resolvable:$true] %s31
      %s33 = sshll.u32 [#allocation7], 4
      %s34 = int_to_ptr.vmem [resolvable:$true] %s33
      %39 = dma.hbm_to_vmem [thread:$0]  %s32, 1024, %s34, [#allocation8], 64, 64, 4
    $region9: #{tpu_custom_call.1} parent=1 // pred_fallthru
      _
    // Predicated region
    $region10: #{tpu_custom_call.1} parent=1 // pred_check
      _
    $region11: #{tpu_custom_call.1} parent=1 // pred_check_branch
      %41 = sbr.rel (0) target = $region13
    $region12: #{tpu_custom_call.1} parent=1 // pred_region
      %43 = vsyncadd [#allocation8], 0
      %s44 = sshll.u32 %s2, 4
      %s45 = int_to_ptr.hbm [resolvable:$true] %s44
      %s46 = sshll.u32 [#allocation9], 4
      %s47 = int_to_ptr.vmem [resolvable:$true] %s46
      %52 = dma.hbm_to_vmem [thread:$0]  %s45, 1024, %s47, [#allocation8], 64, 64, 4
    $region13: #{tpu_custom_call.1} parent=1 // pred_fallthru
      _
    // Predicated region
    $region14: #{tpu_custom_call.1} parent=1 // pred_check
      _
    $region15: #{tpu_custom_call.1} parent=1 // pred_check_branch
      %54 = sbr.rel (0) target = $region17
    $region16: #{tpu_custom_call.1} parent=1 // pred_region
      _
    $region17: #{tpu_custom_call.1} parent=1 // pred_fallthru
      _
    // Predicated region
    $region18: #{tpu_custom_call.1} parent=1 // pred_check
      _
    $region19: #{tpu_custom_call.1} parent=1 // pred_check_branch
      %56 = sbr.rel (0) target = $region21
    $region20: #{tpu_custom_call.1} parent=1 // pred_region
      %58 = vsyncadd [#allocation11], 0
      %s60 = sshll.u32 %s4, 4
      %s61 = int_to_ptr.hbm [resolvable:$true] %s60
      %s62 = sshll.u32 [#allocation10], 4
      %s63 = int_to_ptr.vmem [resolvable:$true] %s62
      %65 = dma.hbm_to_vmem [thread:$0]  %s61, 128, %s63, [#allocation11]
    $region21: #{tpu_custom_call.1} parent=1 // pred_fallthru
      _
    // Predicated region
    $region22: #{tpu_custom_call.1} parent=1 // pred_check
      _
    $region23: #{tpu_custom_call.1} parent=1 // pred_check_branch
      %67 = sbr.rel (0) target = $region25
    $region24: #{tpu_custom_call.1} parent=1 // pred_region
      %69 = dma.done [#allocation5], 512
    $region25: #{tpu_custom_call.1} parent=1 // pred_fallthru
      _
    // Predicated region
    $region26: #{tpu_custom_call.1} parent=1 // pred_check
      _
    $region27: #{tpu_custom_call.1} parent=1 // pred_check_branch
      %71 = sbr.rel (0) target = $region29
    $region28: #{tpu_custom_call.1} parent=1 // pred_region
      %73 = dma.done [#allocation8], 1024
    $region29: #{tpu_custom_call.1} parent=1 // pred_fallthru
      _
    // Predicated region
    $region30: #{tpu_custom_call.1} parent=1 // pred_check
      _
    $region31: #{tpu_custom_call.1} parent=1 // pred_check_branch
      %75 = sbr.rel (0) target = $region33
    $region32: #{tpu_custom_call.1} parent=1 // pred_region
      %77 = dma.done [#allocation8], 1024
    $region33: #{tpu_custom_call.1} parent=1 // pred_fallthru
      _
    // Predicated region
    $region34: #{tpu_custom_call.1} parent=1 // pred_check
      _
    $region35: #{tpu_custom_call.1} parent=1 // pred_check_branch
      %79 = sbr.rel (0) target = $region37
    $region36: #{tpu_custom_call.1} parent=1 // pred_region
      %81 = dma.done [#allocation11], 128
    $region37: #{tpu_custom_call.1} parent=1 // pred_fallthru
      _
    %p82 = scmp.eq.s32.totalorder 0, 0
    // Predicated region
    $region38: #{tpu_custom_call.1} parent=1 // pred_check
      %p83 = pneg %p82
    $region39: #{tpu_custom_call.1} parent=1 // pred_check_branch
      %85 = sbr.rel (%p83) target = $region41
    $region40: #{tpu_custom_call.1} parent=1 // pred_region
      %v86 = vld [vmem:[#allocation10] sm:$0xff]
      %87 = vst [vmem:[#allocation2] sm:$0xff] %v86
    $region41: #{tpu_custom_call.1} parent=1 // pred_fallthru
      _
    %v88 = vld [vmem:[#allocation4] sm:$0xf]
    %v89 = vld [vmem:[#allocation4 + $0x4] sm:$0xf]
    %v90 = vld [vmem:[#allocation4 + $0x8] sm:$0xf]
    %v91 = vld [vmem:[#allocation4 + $0xc] sm:$0xf]
    %v92 = vld [vmem:[#allocation4 + $0x10] sm:$0xf]
    %v93 = vld [vmem:[#allocation4 + $0x14] sm:$0xf]
    %v94 = vld [vmem:[#allocation4 + $0x18] sm:$0xf]
    %v95 = vld [vmem:[#allocation4 + $0x1c] sm:$0xf]
    %v96 = vld [vmem:[#allocation7] sm:$0xf]
    %v97 = vld [vmem:[#allocation7 + $0x4] sm:$0xf]
    %v98 = vld [vmem:[#allocation7 + $0x8] sm:$0xf]
    %v99 = vld [vmem:[#allocation7 + $0xc] sm:$0xf]
    %v100 = vld [vmem:[#allocation7 + $0x10] sm:$0xf]
    %v101 = vld [vmem:[#allocation7 + $0x14] sm:$0xf]
    %v102 = vld [vmem:[#allocation7 + $0x18] sm:$0xf]
    %v103 = vld [vmem:[#allocation7 + $0x1c] sm:$0xf]
    %v104 = vld [vmem:[#allocation7 + $0x20] sm:$0xf]
    %v105 = vld [vmem:[#allocation7 + $0x24] sm:$0xf]
    %v106 = vld [vmem:[#allocation7 + $0x28] sm:$0xf]
    %v107 = vld [vmem:[#allocation7 + $0x2c] sm:$0xf]
    %v108 = vld [vmem:[#allocation7 + $0x30] sm:$0xf]
    %v109 = vld [vmem:[#allocation7 + $0x34] sm:$0xf]
    %v110 = vld [vmem:[#allocation7 + $0x38] sm:$0xf]
    %v111 = vld [vmem:[#allocation7 + $0x3c] sm:$0xf]
    %v120 = vunpack.c.l.b16 %v88
    %v121 = vunpack.c.l.b16 %v89
    %v122 = vunpack.c.l.b16 %v90
    %v123 = vunpack.c.l.b16 %v91
    %v124 = vunpack.c.l.b16 %v92
    %v125 = vunpack.c.l.b16 %v93
    %v126 = vunpack.c.l.b16 %v94
    %v127 = vunpack.c.l.b16 %v95
    %v128 = vpack.c.b16 %v121, %v120
    %v129 = vpack.c.b16 %v123, %v122
    %v130 = vpack.c.b16 %v125, %v124
    %v131 = vpack.c.b16 %v127, %v126
    %v152 = vunpack.c.l.b16 %v96
    %v153 = vunpack.c.l.b16 %v97
    %v154 = vunpack.c.l.b16 %v98
    %v155 = vunpack.c.l.b16 %v99
    %v156 = vunpack.c.l.b16 %v100
    %v157 = vunpack.c.l.b16 %v101
    %v158 = vunpack.c.l.b16 %v102
    %v159 = vunpack.c.l.b16 %v103
    %v160 = vunpack.c.l.b16 %v104
    %v161 = vunpack.c.l.b16 %v105
    %v162 = vunpack.c.l.b16 %v106
    %v163 = vunpack.c.l.b16 %v107
    %v164 = vunpack.c.l.b16 %v108
    %v165 = vunpack.c.l.b16 %v109
    %v166 = vunpack.c.l.b16 %v110
    %v167 = vunpack.c.l.b16 %v111
    %v168 = vpack.c.b16 %v153, %v152
    %v169 = vpack.c.b16 %v155, %v154
    %v170 = vpack.c.b16 %v157, %v156
    %v171 = vpack.c.b16 %v159, %v158
    %v172 = vpack.c.b16 %v161, %v160
    %v173 = vpack.c.b16 %v163, %v162
    %v174 = vpack.c.b16 %v165, %v164
    %v175 = vpack.c.b16 %v167, %v166
    %184 = vmatpush.bf16.msra.mxu0 %v175
    %185 = vmatpush.bf16.msra.mxu0 %v174
    %186 = vmatpush.bf16.msra.mxu0 %v173
    %187 = vmatpush.bf16.msra.mxu0 %v172
    %188 = vmatpush.bf16.msra.mxu0 %v171
    %189 = vmatpush.bf16.msra.mxu0 %v170
    %190 = vmatpush.bf16.msra.mxu0 %v169
    %191 = vmatpush.bf16.msra.mxu0 %v168
    %192 = vmatmul.bf16.gmra.mxu0 %v128
    %v193 = vpop.f32.mrf.mxu0
    %v194 = vadd.f32 0.0, %v193
    %v195 = vpop.f32.mrf.mxu0
    %v196 = vadd.f32 0.0, %v195
    %197 = vmatmul.bf16.gmra.mxu0 %v129
    %v198 = vpop.f32.mrf.mxu0
    %v199 = vadd.f32 0.0, %v198
    %v200 = vpop.f32.mrf.mxu0
    %v201 = vadd.f32 0.0, %v200
    %202 = vmatmul.bf16.gmra.mxu0 %v130
    %v203 = vpop.f32.mrf.mxu0
    %v204 = vadd.f32 0.0, %v203
    %v205 = vpop.f32.mrf.mxu0
    %v206 = vadd.f32 0.0, %v205
    %207 = vmatmul.bf16.gmra.mxu0 %v131
    %v208 = vpop.f32.mrf.mxu0
    %v209 = vadd.f32 0.0, %v208
    %v210 = vpop.f32.mrf.mxu0
    %v211 = vadd.f32 0.0, %v210
    %212 = vdwg.mxu0
    %v213 = vld [vmem:[%s3] sm:$0x1]
    %v215 = vperm.slane %v213, 0
    %v217 = vadd.f32 %v194, %v215
    %v218 = vadd.f32 %v196, %v215
    %v219 = vadd.f32 %v199, %v215
    %v220 = vadd.f32 %v201, %v215
    %v221 = vadd.f32 %v204, %v215
    %v222 = vadd.f32 %v206, %v215
    %v223 = vadd.f32 %v209, %v215
    %v224 = vadd.f32 %v211, %v215
    %225 = vst [vmem:[#allocation3] sm:$0xff] %v217
    %226 = vst [vmem:[#allocation3 + $0x8] sm:$0xff] %v218
    %227 = vst [vmem:[#allocation3 + $0x10] sm:$0xff] %v219
    %228 = vst [vmem:[#allocation3 + $0x18] sm:$0xff] %v220
    %229 = vst [vmem:[#allocation3 + $0x20] sm:$0xff] %v221
    %230 = vst [vmem:[#allocation3 + $0x28] sm:$0xff] %v222
    %231 = vst [vmem:[#allocation3 + $0x30] sm:$0xff] %v223
    %232 = vst [vmem:[#allocation3 + $0x38] sm:$0xff] %v224
    %v233 = vld [vmem:[#allocation9] sm:$0xf]
    %v234 = vld [vmem:[#allocation9 + $0x4] sm:$0xf]
    %v235 = vld [vmem:[#allocation9 + $0x8] sm:$0xf]
    %v236 = vld [vmem:[#allocation9 + $0xc] sm:$0xf]
    %v237 = vld [vmem:[#allocation9 + $0x10] sm:$0xf]
    %v238 = vld [vmem:[#allocation9 + $0x14] sm:$0xf]
    %v239 = vld [vmem:[#allocation9 + $0x18] sm:$0xf]
    %v240 = vld [vmem:[#allocation9 + $0x1c] sm:$0xf]
    %v241 = vld [vmem:[#allocation9 + $0x20] sm:$0xf]
    %v242 = vld [vmem:[#allocation9 + $0x24] sm:$0xf]
    %v243 = vld [vmem:[#allocation9 + $0x28] sm:$0xf]
    %v244 = vld [vmem:[#allocation9 + $0x2c] sm:$0xf]
    %v245 = vld [vmem:[#allocation9 + $0x30] sm:$0xf]
    %v246 = vld [vmem:[#allocation9 + $0x34] sm:$0xf]
    %v247 = vld [vmem:[#allocation9 + $0x38] sm:$0xf]
    %v248 = vld [vmem:[#allocation9 + $0x3c] sm:$0xf]
    %v249 = vld [vmem:[#allocation2] sm:$0xff]
    %v250 = vld [vmem:[#allocation3] sm:$0xff]
    %v251 = vpack.c.bf16 %v249, %v249
    %v268 = vunpack.c.l.b16 %v233
    %v269 = vunpack.c.l.b16 %v234
    %v270 = vunpack.c.l.b16 %v235
    %v271 = vunpack.c.l.b16 %v236
    %v272 = vunpack.c.l.b16 %v237
    %v273 = vunpack.c.l.b16 %v238
    %v274 = vunpack.c.l.b16 %v239
    %v275 = vunpack.c.l.b16 %v240
    %v276 = vunpack.c.l.b16 %v241
    %v277 = vunpack.c.l.b16 %v242
    %v278 = vunpack.c.l.b16 %v243
    %v279 = vunpack.c.l.b16 %v244
    %v280 = vunpack.c.l.b16 %v245
    %v281 = vunpack.c.l.b16 %v246
    %v282 = vunpack.c.l.b16 %v247
    %v283 = vunpack.c.l.b16 %v248
    %v284 = vpack.c.b16 %v269, %v268
    %v285 = vpack.c.b16 %v271, %v270
    %v286 = vpack.c.b16 %v273, %v272
    %v287 = vpack.c.b16 %v275, %v274
    %v288 = vpack.c.b16 %v277, %v276
    %v289 = vpack.c.b16 %v279, %v278
    %v290 = vpack.c.b16 %v281, %v280
    %v291 = vpack.c.b16 %v283, %v282
    %300 = vmatpush.bf16.msra.mxu0 %v291
    %301 = vmatpush.bf16.msra.mxu0 %v290
    %302 = vmatpush.bf16.msra.mxu0 %v289
    %303 = vmatpush.bf16.msra.mxu0 %v288
    %304 = vmatpush.bf16.msra.mxu0 %v287
    %305 = vmatpush.bf16.msra.mxu0 %v286
    %306 = vmatpush.bf16.msra.mxu0 %v285
    %307 = vmatpush.bf16.msra.mxu0 %v284
    %308 = vmatmul.bf16.gmra.mxu0 %v251
    %v309 = vpop.f32.mrf.mxu0
    %v310 = vadd.f32 0.0, %v309
    %v311 = vpop.f32.mrf.mxu0
    %312 = vdwg.mxu0
    %v313 = vadd.f32 %v250, %v310
    %v314 = vtanh.pop %v313
    %315 = vst [vmem:[#allocation12] sm:$0xff] %v314
    %s316 = scalar_lea.vmem [#allocation3], 8
    %v317 = vld [vmem:[%s316] sm:$0xff]
    %v318 = vpack.c.bf16 %v314, %v314
    %319 = vmatpush.bf16.msra.mxu0 %v291
    %320 = vmatpush.bf16.msra.mxu0 %v290
    %321 = vmatpush.bf16.msra.mxu0 %v289
    %322 = vmatpush.bf16.msra.mxu0 %v288
    %323 = vmatpush.bf16.msra.mxu0 %v287
    %324 = vmatpush.bf16.msra.mxu0 %v286
    %325 = vmatpush.bf16.msra.mxu0 %v285
    %326 = vmatpush.bf16.msra.mxu0 %v284
    %327 = vmatmul.bf16.gmra.mxu0 %v318
    %v328 = vpop.f32.mrf.mxu0
    %v329 = vadd.f32 0.0, %v328
    %v330 = vpop.f32.mrf.mxu0
    %331 = vdwg.mxu0
    %v332 = vadd.f32 %v317, %v329
    %v333 = vtanh.pop %v332
    %s334 = scalar_lea.vmem [#allocation12], 8
    %335 = vst [vmem:[%s334] sm:$0xff] %v333
    %s336 = scalar_lea.vmem [#allocation3], 16
    %v337 = vld [vmem:[%s336] sm:$0xff]
    %v338 = vpack.c.bf16 %v333, %v333
    %339 = vmatpush.bf16.msra.mxu0 %v291
    %340 = vmatpush.bf16.msra.mxu0 %v290
    %341 = vmatpush.bf16.msra.mxu0 %v289
    %342 = vmatpush.bf16.msra.mxu0 %v288
    %343 = vmatpush.bf16.msra.mxu0 %v287
    %344 = vmatpush.bf16.msra.mxu0 %v286
    %345 = vmatpush.bf16.msra.mxu0 %v285
    %346 = vmatpush.bf16.msra.mxu0 %v284
    %347 = vmatmul.bf16.gmra.mxu0 %v338
    %v348 = vpop.f32.mrf.mxu0
    %v349 = vadd.f32 0.0, %v348
    %v350 = vpop.f32.mrf.mxu0
    %351 = vdwg.mxu0
    %v352 = vadd.f32 %v337, %v349
    %v353 = vtanh.pop %v352
    %s354 = scalar_lea.vmem [#allocation12], 16
    %355 = vst [vmem:[%s354] sm:$0xff] %v353
    %s356 = scalar_lea.vmem [#allocation3], 24
    %v357 = vld [vmem:[%s356] sm:$0xff]
    %v358 = vpack.c.bf16 %v353, %v353
    %359 = vmatpush.bf16.msra.mxu0 %v291
    %360 = vmatpush.bf16.msra.mxu0 %v290
    %361 = vmatpush.bf16.msra.mxu0 %v289
    %362 = vmatpush.bf16.msra.mxu0 %v288
    %363 = vmatpush.bf16.msra.mxu0 %v287
    %364 = vmatpush.bf16.msra.mxu0 %v286
    %365 = vmatpush.bf16.msra.mxu0 %v285
    %366 = vmatpush.bf16.msra.mxu0 %v284
    %367 = vmatmul.bf16.gmra.mxu0 %v358
    %v368 = vpop.f32.mrf.mxu0
    %v369 = vadd.f32 0.0, %v368
    %v370 = vpop.f32.mrf.mxu0
    %371 = vdwg.mxu0
    %v372 = vadd.f32 %v357, %v369
    %v373 = vtanh.pop %v372
    %s374 = scalar_lea.vmem [#allocation12], 24
    %375 = vst [vmem:[%s374] sm:$0xff] %v373
    %s376 = scalar_lea.vmem [#allocation3], 32
    %v377 = vld [vmem:[%s376] sm:$0xff]
    %v378 = vpack.c.bf16 %v373, %v373
    %379 = vmatpush.bf16.msra.mxu0 %v291
    %380 = vmatpush.bf16.msra.mxu0 %v290
    %381 = vmatpush.bf16.msra.mxu0 %v289
    %382 = vmatpush.bf16.msra.mxu0 %v288
    %383 = vmatpush.bf16.msra.mxu0 %v287
    %384 = vmatpush.bf16.msra.mxu0 %v286
    %385 = vmatpush.bf16.msra.mxu0 %v285
    %386 = vmatpush.bf16.msra.mxu0 %v284
    %387 = vmatmul.bf16.gmra.mxu0 %v378
    %v388 = vpop.f32.mrf.mxu0
    %v389 = vadd.f32 0.0, %v388
    %v390 = vpop.f32.mrf.mxu0
    %391 = vdwg.mxu0
    %v392 = vadd.f32 %v377, %v389
    %v393 = vtanh.pop %v392
    %s394 = scalar_lea.vmem [#allocation12], 32
    %395 = vst [vmem:[%s394] sm:$0xff] %v393
    %s396 = scalar_lea.vmem [#allocation3], 40
    %v397 = vld [vmem:[%s396] sm:$0xff]
    %v398 = vpack.c.bf16 %v393, %v393
    %399 = vmatpush.bf16.msra.mxu0 %v291
    %400 = vmatpush.bf16.msra.mxu0 %v290
    %401 = vmatpush.bf16.msra.mxu0 %v289
    %402 = vmatpush.bf16.msra.mxu0 %v288
    %403 = vmatpush.bf16.msra.mxu0 %v287
    %404 = vmatpush.bf16.msra.mxu0 %v286
    %405 = vmatpush.bf16.msra.mxu0 %v285
    %406 = vmatpush.bf16.msra.mxu0 %v284
    %407 = vmatmul.bf16.gmra.mxu0 %v398
    %v408 = vpop.f32.mrf.mxu0
    %v409 = vadd.f32 0.0, %v408
    %v410 = vpop.f32.mrf.mxu0
    %411 = vdwg.mxu0
    %v412 = vadd.f32 %v397, %v409
    %v413 = vtanh.pop %v412
    %s414 = scalar_lea.vmem [#allocation12], 40
    %415 = vst [vmem:[%s414] sm:$0xff] %v413
    %s416 = scalar_lea.vmem [#allocation3], 48
    %v417 = vld [vmem:[%s416] sm:$0xff]
    %v418 = vpack.c.bf16 %v413, %v413
    %419 = vmatpush.bf16.msra.mxu0 %v291
    %420 = vmatpush.bf16.msra.mxu0 %v290
    %421 = vmatpush.bf16.msra.mxu0 %v289
    %422 = vmatpush.bf16.msra.mxu0 %v288
    %423 = vmatpush.bf16.msra.mxu0 %v287
    %424 = vmatpush.bf16.msra.mxu0 %v286
    %425 = vmatpush.bf16.msra.mxu0 %v285
    %426 = vmatpush.bf16.msra.mxu0 %v284
    %427 = vmatmul.bf16.gmra.mxu0 %v418
    %v428 = vpop.f32.mrf.mxu0
    %v429 = vadd.f32 0.0, %v428
    %v430 = vpop.f32.mrf.mxu0
    %431 = vdwg.mxu0
    %v432 = vadd.f32 %v417, %v429
    %v433 = vtanh.pop %v432
    %s434 = scalar_lea.vmem [#allocation12], 48
    %435 = vst [vmem:[%s434] sm:$0xff] %v433
    %s436 = scalar_lea.vmem [#allocation3], 56
    %v437 = vld [vmem:[%s436] sm:$0xff]
    %v438 = vpack.c.bf16 %v433, %v433
    %439 = vmatpush.bf16.msra.mxu0 %v291
    %440 = vmatpush.bf16.msra.mxu0 %v290
    %441 = vmatpush.bf16.msra.mxu0 %v289
    %442 = vmatpush.bf16.msra.mxu0 %v288
    %443 = vmatpush.bf16.msra.mxu0 %v287
    %444 = vmatpush.bf16.msra.mxu0 %v286
    %445 = vmatpush.bf16.msra.mxu0 %v285
    %446 = vmatpush.bf16.msra.mxu0 %v284
    %447 = vmatmul.bf16.gmra.mxu0 %v438
    %v448 = vpop.f32.mrf.mxu0
    %v449 = vadd.f32 0.0, %v448
    %v450 = vpop.f32.mrf.mxu0
    %451 = vdwg.mxu0
    %v452 = vadd.f32 %v437, %v449
    %v453 = vtanh.pop %v452
    %s454 = scalar_lea.vmem [#allocation12], 56
    %455 = vst [vmem:[%s454] sm:$0xff] %v453
    %456 = vst [vmem:[#allocation2] sm:$0xff] %v453
    // Predicated region
    $region42: #{tpu_custom_call.1} parent=1 // pred_check
      _
    $region43: #{tpu_custom_call.1} parent=1 // pred_check_branch
      %458 = sbr.rel (0) target = $region45
    $region44: #{tpu_custom_call.1} parent=1 // pred_region
      %460 = vsyncadd [#allocation6], 0
      %s461 = sshll.u32 [#allocation12], 4
      %s462 = int_to_ptr.vmem [resolvable:$true] %s461
      %s463 = sshll.u32 %s5, 4
      %s464 = int_to_ptr.hbm [resolvable:$true] %s463
      %469 = dma.vmem_to_hbm [thread:$0]  %s462, 1024, %s464, [#allocation6], 128, 128, 8
    $region45: #{tpu_custom_call.1} parent=1 // pred_fallthru
      _
    // Predicated region
    $region46: #{tpu_custom_call.1} parent=1 // pred_check
      _
    $region47: #{tpu_custom_call.1} parent=1 // pred_check_branch
      %471 = sbr.rel (0) target = $region49
    $region48: #{tpu_custom_call.1} parent=1 // pred_region
      %473 = dma.done [#allocation6], 1024
    $region49: #{tpu_custom_call.1} parent=1 // pred_fallthru
      _
    %474 = vsyncpa [#allocation5], 1
    %475 = vsyncpa [#allocation8], 1
    %476 = vsyncpa [#allocation11], 1
    %477 = vsyncpa [#allocation6], 1

</llo_original>
